<compile_context>
chip_gen: v6e
topology: v6e:2x2x1
jax: 0.10.0
libtpu: 0.0.40
codegen_flags: <defaults>
</compile_context>

<pallas_src>
import numpy as np

import jax
import jax.numpy as jnp
from jax import lax
from jax.experimental import pallas as pl
from jax.experimental.pallas import tpu as pltpu

_LANE = 128                  # lane width of the packed buffer (last dim)
_SUB = 8                     # f32 sublanes per vreg
_CHUNK_ROWS = 256            # in-kernel chunk: (256, 128) f32 = 32 vregs
_DEFAULT_TILE_ROWS = 8192    # 8192 * 128 * 4B = 4 MiB data block per grid step
_VMEM_LIMIT_BYTES = 32 * 1024 * 1024


def _round_up(x, m):
    return (x + m - 1) // m * m


def _make_kernel(chunks_per_tile, chunk_rows):
    """Kernel for one (TR, 128) row-tile.

    Emits a (1, 2, 128) lane-dense partial:
      row 0 = sum over tile of (c1/numel) * |x|   (weight rows)
      row 1 = sum over tile of (c2/numel) * |x|   (bias rows)
    The per-row scales are applied with an MXU dot so the VPU only does the
    cast + abs; the loop bounds live ranges to one chunk.
    """

    def kernel(data_ref, inv_ref, out_ref):
        if chunks_per_tile == 1:
            a = jnp.abs(data_ref[...].astype(jnp.float32))        # (TR, 128)
            out_ref[...] = jnp.dot(inv_ref[0], a,
                                   preferred_element_type=jnp.float32)[None]
            return

        def body(j, acc):
            r0 = pl.multiple_of(j * chunk_rows, chunk_rows)
            a = jnp.abs(
                data_ref[pl.ds(r0, chunk_rows), :].astype(jnp.float32))
            return acc + jnp.dot(inv_ref[j], a,
                                 preferred_element_type=jnp.float32)

        acc = lax.fori_loop(
            0, chunks_per_tile, body,
            jnp.zeros((2, _LANE), jnp.float32),
            unroll=2 if chunks_per_tile % 2 == 0 else 1)
        out_ref[...] = acc[None]

    return kernel


def _pack(weights, biases, tile_rows):
    """Ragged-concat packing (native dtype) + lane-dense per-row inv operand.

    Every parameter is flattened and zero-padded only to the next multiple of
    128, so HBM read is ~sum(numel).  The inv operand depends only on shapes
    and is built host-side (numpy), so it is a jit-time constant.
    """
    params = list(weights) + list(biases)
    dtypes = {jnp.dtype(p.dtype) for p in params}
    if len(dtypes) == 1:
        pack_dtype = dtypes.pop()
    else:
        # TODO(synk): pack one buffer (or run one pallas_call) per dtype so
        # bf16/int8 params are not silently promoted; promote to f32 for now.
        pack_dtype = jnp.dtype(jnp.float32)
    # Packed-sublane multiple for the second-minor dim: 8 (f32), 16 (bf16), 32.
    sub = max(_SUB, _SUB * (4 // pack_dtype.itemsize))

    c1 = 1.0 / float(len(weights))
    c2 = 1.0 / float(len(biases))

    chunks, inv_w, inv_b = [], [], []

    def add_group(group, scale, own, other):
        for p in group:
            n = int(p.size)
            rows = _round_up(n, _LANE) // _LANE
            flat = jnp.ravel(p)
            if flat.dtype != pack_dtype:
                flat = flat.astype(pack_dtype)
            chunks.append(jnp.pad(flat, (0, rows * _LANE - n)))
            own.append(np.full((rows,), scale / n, np.float32))
            other.append(np.zeros((rows,), np.float32))

    # Weights first, then biases (each group contiguous in the packed buffer).
    add_group(weights, c1, inv_w, inv_b)
    add_group(biases, c2, inv_b, inv_w)

    r0 = sum(int(c.shape[0]) for c in chunks) // _LANE

    # Tile / chunk selection (static, from shapes only).
    tr = _round_up(max(int(tile_rows), sub), sub)
    tr = min(tr, _round_up(r0, sub))
    if tr > _CHUNK_ROWS:
        cr = _CHUNK_ROWS
        tr = _round_up(tr, 2 * cr)       # even chunk count -> unroll=2 is safe
    else:
        cr = tr                          # single chunk per tile
    r = _round_up(r0, tr)
    num_tiles = r // tr
    chunks_per_tile = tr // cr

    data = jnp.concatenate(chunks)
    data = jnp.pad(data, (0, (r - r0) * _LANE)).reshape(r, _LANE)

    inv = np.stack([np.concatenate(inv_w), np.concatenate(inv_b)])   # (2, r0)
    inv = np.pad(inv, ((0, 0), (0, r - r0)))                         # (2, r)
    inv3 = np.ascontiguousarray(
        inv.reshape(2, r // cr, cr).transpose(1, 0, 2))              # (nc, 2, cr)

    return data, jnp.asarray(inv3), tr, cr, chunks_per_tile, num_tiles


def l1wb_loss(weights, biases, *, tile_rows=_DEFAULT_TILE_ROWS):
    """Pallas implementation of L1WbLoss.forward()."""
    assert len(weights) > 0 and len(biases) > 0
    data, inv3, tr, cr, cpt, num_tiles = _pack(weights, biases, tile_rows)

    partials = pl.pallas_call(
        _make_kernel(cpt, cr),
        out_shape=jax.ShapeDtypeStruct((num_tiles, 2, _LANE), jnp.float32),
        grid=(num_tiles,),
        in_specs=[
            # Packed parameter values, (TR, 128) per step (native dtype).
            pl.BlockSpec((tr, _LANE), lambda i: (i, 0)),
            # Lane-dense per-row [c1/numel | c2/numel], (cpt, 2, CR) per step.
            pl.BlockSpec((cpt, 2, cr), lambda i: (i, 0, 0)),
        ],
        out_specs=pl.BlockSpec((1, 2, _LANE), lambda i: (i, 0, 0)),
        compiler_params=pltpu.CompilerParams(
            dimension_semantics=("parallel",),
            vmem_limit_bytes=_VMEM_LIMIT_BYTES),
    )(data, inv3)

    s1c1 = jnp.sum(partials[:, 0, :])   # == c1 * sum_p mean(|weight_p|)
    s2c2 = jnp.sum(partials[:, 1, :])   # == c2 * sum_p mean(|bias_p|)
    return s1c1 / (s2c2 + 1e-6)


def _reference(weights, biases):
    s1 = sum(jnp.mean(jnp.abs(p.astype(jnp.float32))) for p in weights)
    s2 = sum(jnp.mean(jnp.abs(p.astype(jnp.float32))) for p in biases)
    c1 = 1.0 / len(weights)
    c2 = 1.0 / len(biases)
    return s1 * c1 / (s2 * c2 + 1e-6)


if __name__ == "__main__":
    key = jax.random.PRNGKey(0)
    k = jax.random.split(key, 8)

    # Small synthetic "model" parameters (a tiny conv net):
    #   conv1: weight (4, 3, 3, 3),  bias (4,)
    #   conv2: weight (8, 4, 3, 3),  bias (8,)
    #   fc:    weight (10, 128),     bias (10,)
    weights = [
        jax.random.normal(k[0], (4, 3, 3, 3), jnp.float32),
        jax.random.normal(k[1], (8, 4, 3, 3), jnp.float32),
        jax.random.normal(k[2], (10, 128), jnp.float32),
    ]
    biases = [
        jax.random.normal(k[3], (4,), jnp.float32),
        jax.random.normal(k[4], (8,), jnp.float32),
        jax.random.normal(k[5], (10,), jnp.float32),
    ]

    ref = jax.block_until_ready(_reference(weights, biases))

    # Default tile (single block for this tiny model).
    out = jax.block_until_ready(l1wb_loss(weights, biases))
    assert jnp.allclose(out, ref, rtol=1e-5, atol=1e-5), (out, ref)

    # Small tile to exercise the multi-block "parallel" grid path.
    out_tiled = jax.block_until_ready(l1wb_loss(weights, biases, tile_rows=8))
    assert jnp.allclose(out_tiled, ref, rtol=1e-5, atol=1e-5), (out_tiled, ref)

    # Medium model: forces multi-tile grid AND the in-kernel multi-chunk
    # fori_loop path (dynamic row slicing + MXU-dot accumulate).
    weights_m = weights + [jax.random.normal(k[6], (256, 512), jnp.float32)]
    biases_m = biases + [jax.random.normal(k[7], (256,), jnp.float32)]
    ref_m = jax.block_until_ready(_reference(weights_m, biases_m))
    out_m = jax.block_until_ready(l1wb_loss(weights_m, biases_m, tile_rows=512))
    assert jnp.allclose(out_m, ref_m, rtol=1e-5, atol=1e-5), (out_m, ref_m)
    out_m2 = jax.block_until_ready(l1wb_loss(weights_m, biases_m))
    assert jnp.allclose(out_m2, ref_m, rtol=1e-5, atol=1e-5), (out_m2, ref_m)

    # All-bf16 parameters: packed natively in bf16 (no upcast in the pack
    # pass), cast to f32 inside the kernel, rows rounded to the bf16 multiple.
    wb = [p.astype(jnp.bfloat16) for p in weights]
    bb = [p.astype(jnp.bfloat16) for p in biases]
    ref_b = jax.block_until_ready(_reference(wb, bb))
    out_b = jax.block_until_ready(l1wb_loss(wb, bb))
    assert jnp.allclose(out_b, ref_b, rtol=1e-4, atol=1e-4), (out_b, ref_b)

    print("KERNEL_OK")
</pallas_src>

<mosaic_0001>
module attributes {stable_mosaic.version = 11 : i64} {
  func.func @kernel(%arg0: i32, %arg1: memref<24x128xf32, #tpu.memory_space<vmem>>, %arg2: memref<1x2x24xf32, #tpu.memory_space<vmem>>, %arg3: memref<1x2x128xf32, #tpu.memory_space<vmem>>) attributes {dimension_semantics = [#tpu.dimension_semantics<parallel>], iteration_bounds = array<i64: 1>, scalar_prefetch = 0 : i64, scratch_operands = 0 : i64, tpu.core_type = #tpu.core_type<tc>, window_params = [{transform_indices = @transform_0, window_bounds = array<i64: 24, 128>}, {transform_indices = @transform_1, window_bounds = array<i64: 1, 2, 24>}, {transform_indices = @transform_2, window_bounds = array<i64: 1, 2, 128>}]} {
    %c0 = arith.constant 0 : index
    %c0_0 = arith.constant 0 : index
    %0 = vector.load %arg1[%c0, %c0_0] : memref<24x128xf32, #tpu.memory_space<vmem>>, vector<24x128xf32>
    %1 = math.absf %0 : vector<24x128xf32>
    %c0_1 = arith.constant 0 : index
    %c0_2 = arith.constant 0 : index
    %c0_3 = arith.constant 0 : index
    %2 = vector.load %arg2[%c0_1, %c0_2, %c0_3] : memref<1x2x24xf32, #tpu.memory_space<vmem>>, vector<1x2x24xf32>
    %3 = vector.shape_cast %2 : vector<1x2x24xf32> to vector<2x24xf32>
    %cst = arith.constant dense<0.000000e+00> : vector<2x128xf32>
    %4 = tpu.matmul %3, %1, %cst {dimension_numbers = #tpu.dot_dimension_numbers<[1], [0], [0], [1], [0, 0, 1, 1], [], []>} : vector<2x24xf32>, vector<24x128xf32>, vector<2x128xf32> -> vector<2x128xf32>
    %5 = vector.shape_cast %4 : vector<2x128xf32> to vector<1x2x128xf32>
    %c0_4 = arith.constant 0 : index
    %c0_5 = arith.constant 0 : index
    %c0_6 = arith.constant 0 : index
    %6 = vector.load %arg3[%c0_4, %c0_5, %c0_6] : memref<1x2x128xf32, #tpu.memory_space<vmem>>, vector<1x2x128xf32>
    tpu.vector_store %arg3[%c0_4, %c0_5, %c0_6], %5 {strides = array<i32>} : memref<1x2x128xf32, #tpu.memory_space<vmem>>, vector<1x2x128xf32>,
    return
  }
  func.func @transform_0(%arg0: i32) -> (i32, i32) {
    %c0_i32 = arith.constant 0 : i32
    %c0_i32_0 = arith.constant 0 : i32
    return %arg0, %c0_i32 : i32, i32
  }
  func.func @transform_1(%arg0: i32) -> (i32, i32, i32) {
    %c0_i32 = arith.constant 0 : i32
    %c0_i32_0 = arith.constant 0 : i32
    %c0_i32_1 = arith.constant 0 : i32
    return %arg0, %c0_i32, %c0_i32_0 : i32, i32, i32
  }
  func.func @transform_2(%arg0: i32) -> (i32, i32, i32) {
    %c0_i32 = arith.constant 0 : i32
    %c0_i32_0 = arith.constant 0 : i32
    %c0_i32_1 = arith.constant 0 : i32
    return %arg0, %c0_i32, %c0_i32_0 : i32, i32, i32
  }
}

</mosaic_0001>

<llo_original>
// kernel: tpu_custom_call.1
$region0: #{tpu_custom_call.1}
  #allocation0 [shape = 'u32[]', space=smem, size = 0x4, offset = 0x4, fixed_abs, tag = 'smem constant byte address 0x4 - core index']
  #allocation1 [shape = 'u32[144,128]{1,0:T(1,128)}', space=vmem, size = 0x12000, scoped, tag = 'internal scratch']
  %s0 = inlined_call_operand.hbm [shape: f32[24,128], index: 0, kind: input, shape index: {}]
  %s1 = inlined_call_operand.hbm [shape: f32[1,2,24], index: 1, kind: input, shape index: {}]
  %s2 = inlined_call_operand.hbm [shape: f32[1,2,128], index: 2, kind: output, shape index: {}]
  %s3 = sld [smem:[#allocation0]]
  $region26: #{tpu_custom_call.1} parent=0
    _
  %s5 = ssub.s32 1, %s3
  %s6 = scalar_select 0, %s5, %s3
  $region1: #{tpu_custom_call.1} parent=0
    #allocation2 [shape = 'u8[12288]{0}', space=vmem, size = 0x3000, scoped, tag = 'input window, operand 0, single buffered']
    #allocation3 [shape = 's32[1]{0}', space=sflag, size = 0x4, scoped, tag = 'scoped memory for tpu_custom_call.1']
    #allocation4 [shape = 's32[1]{0}', space=sflag, size = 0x4, scoped, tag = 'scoped memory for tpu_custom_call.1']
    #allocation5 [shape = 'u8[1024]{0}', space=vmem, size = 0x400, scoped, tag = 'input window, operand 1, single buffered']
    #allocation6 [shape = 's32[1]{0}', space=sflag, size = 0x4, scoped, tag = 'scoped memory for tpu_custom_call.1']
    #allocation7 [shape = 'u8[1024]{0}', space=vmem, size = 0x400, scoped, tag = 'output window, operand 0, single buffered']
    %7 = vsyncpa [#allocation3], 0
    %8 = vsyncpa [#allocation6], 0
    %9 = vsyncpa [#allocation4], 0
    // Predicated region
    $region2: #{tpu_custom_call.1} parent=1 // pred_check
      _
    $region3: #{tpu_custom_call.1} parent=1 // pred_check_branch
      %11 = sbr.rel (0) target = $region5
    $region4: #{tpu_custom_call.1} parent=1 // pred_region
      %s13 = ssub.s32 384, 384
      %14 = vsyncadd [#allocation3], %s13
      %s15 = sshll.u32 [#allocation2], 4
      %s16 = int_to_ptr.vmem [resolvable:$true] %s15
      %21 = dma.hbm_to_vmem [thread:$0]  %s0, 384, %s16, [#allocation3], 128, 128, 8
    $region5: #{tpu_custom_call.1} parent=1 // pred_fallthru
      _
    // Predicated region
    $region6: #{tpu_custom_call.1} parent=1 // pred_check
      _
    $region7: #{tpu_custom_call.1} parent=1 // pred_check_branch
      %23 = sbr.rel (0) target = $region9
    $region8: #{tpu_custom_call.1} parent=1 // pred_region
      %s25 = ssub.s32 32, 32
      %26 = vsyncadd [#allocation6], %s25
      %s28 = sshll.u32 [#allocation5], 4
      %s29 = int_to_ptr.vmem [resolvable:$true] %s28
      %31 = dma.hbm_to_vmem [thread:$0]  %s1, 32, %s29, [#allocation6]
    $region9: #{tpu_custom_call.1} parent=1 // pred_fallthru
      _
    // Predicated region
    $region10: #{tpu_custom_call.1} parent=1 // pred_check
      _
    $region11: #{tpu_custom_call.1} parent=1 // pred_check_branch
      %33 = sbr.rel (0) target = $region13
    $region12: #{tpu_custom_call.1} parent=1 // pred_region
      %34 = dma.done [#allocation3], 384
    $region13: #{tpu_custom_call.1} parent=1 // pred_fallthru
      _
    // Predicated region
    $region14: #{tpu_custom_call.1} parent=1 // pred_check
      _
    $region15: #{tpu_custom_call.1} parent=1 // pred_check_branch
      %36 = sbr.rel (0) target = $region17
    $region16: #{tpu_custom_call.1} parent=1 // pred_region
      %37 = dma.done [#allocation6], 32
    $region17: #{tpu_custom_call.1} parent=1 // pred_fallthru
      _
    %v38 = vld [vmem:[#allocation2] sm:$0xff]
    %v39 = vld [vmem:[#allocation2 + $0x8] sm:$0xff]
    %v40 = vld [vmem:[#allocation2 + $0x10] sm:$0xff]
    %v41 = vand.u32 2147483647, %v38
    %v42 = vand.u32 2147483647, %v39
    %v43 = vand.u32 2147483647, %v40
    %v44 = vld [vmem:[#allocation5] sm:$0x3]
    %vm45 = vcmask 195584
    %v47 = vsel %vm45, %v44, 0
    %49 = vmatprep.subr.mxu0 0.0
    %50 = vmatpush1.msra.mxu0 0.0
    %51 = vmatprep.subr.mxu0 0.0
    %52 = vmatpush1.msra.mxu0 0.0
    %53 = vmatprep.subr.mxu0 0.0
    %54 = vmatpush1.msra.mxu0 0.0
    %55 = vmatprep.subr.mxu0 0.0
    %56 = vmatpush1.msra.mxu0 0.0
    %57 = vmatprep.subr.mxu0 0.0
    %58 = vmatpush1.msra.mxu0 0.0
    %59 = vmatprep.subr.mxu0 0.0
    %60 = vmatpush1.msra.mxu0 0.0
    %61 = vmatprep.subr.mxu0 0.0
    %62 = vmatpush1.msra.mxu0 0.0
    %63 = vmatprep.subr.mxu0 0.0
    %64 = vmatpush1.msra.mxu0 0.0
    %65 = vmatprep.subr.mxu0 0.0
    %66 = vmatpush1.msra.mxu0 0.0
    %67 = vmatprep.subr.mxu0 0.0
    %68 = vmatpush1.msra.mxu0 0.0
    %69 = vmatprep.subr.mxu0 0.0
    %70 = vmatpush1.msra.mxu0 0.0
    %71 = vmatprep.subr.mxu0 0.0
    %72 = vmatpush1.msra.mxu0 0.0
    %73 = vmatprep.subr.mxu0 0.0
    %74 = vmatpush1.msra.mxu0 0.0
    %75 = vmatprep.subr.mxu0 0.0
    %76 = vmatpush1.msra.mxu0 %v43
    %77 = vmatprep.subr.mxu0 0.0
    %78 = vmatpush1.msra.mxu0 %v42
    %79 = vmatprep.subr.mxu0 0.0
    %80 = vmatpush1.msra.mxu0 %v41
    %81 = vmatprep.subr.mxu0 0.0
    %82 = vmatpush2.msra.mxu0 0.0
    %83 = vmatprep.subr.mxu0 0.0
    %84 = vmatpush2.msra.mxu0 0.0
    %85 = vmatprep.subr.mxu0 0.0
    %86 = vmatpush2.msra.mxu0 0.0
    %87 = vmatprep.subr.mxu0 0.0
    %88 = vmatpush2.msra.mxu0 0.0
    %89 = vmatprep.subr.mxu0 0.0
    %90 = vmatpush2.msra.mxu0 0.0
    %91 = vmatprep.subr.mxu0 0.0
    %92 = vmatpush2.msra.mxu0 0.0
    %93 = vmatprep.subr.mxu0 0.0
    %94 = vmatpush2.msra.mxu0 0.0
    %95 = vmatprep.subr.mxu0 0.0
    %96 = vmatpush2.msra.mxu0 0.0
    %97 = vmatprep.subr.mxu0 0.0
    %98 = vmatpush2.msra.mxu0 0.0
    %99 = vmatprep.subr.mxu0 0.0
    %100 = vmatpush2.msra.mxu0 0.0
    %101 = vmatprep.subr.mxu0 0.0
    %102 = vmatpush2.msra.mxu0 0.0
    %103 = vmatprep.subr.mxu0 0.0
    %104 = vmatpush2.msra.mxu0 0.0
    %105 = vmatprep.subr.mxu0 0.0
    %106 = vmatpush2.msra.mxu0 0.0
    %107 = vmatprep.subr.mxu0 0.0
    %108 = vmatpush2.msra.mxu0 0.0
    %109 = vmatprep.subr.mxu0 0.0
    %110 = vmatpush2.msra.mxu0 0.0
    %111 = vmatprep.subr.mxu0 0.0
    %112 = vmatpush2.msra.mxu0 0.0
    %113 = vmatprep.mubr.f32.mxu0 0.0
    %114 = vmatmul.mubr.f32.gmra.mxu0 %v47
    %v115 = vpop.f32.mrf.mxu0
    %v116 = vadd.f32 0.0, %v115
    %v117 = vpop.f32.mrf.mxu0
    %118 = vdwg.mxu0
    %119 = vst [vmem:[#allocation7] sm:$0x3] %v116
    // Predicated region
    $region18: #{tpu_custom_call.1} parent=1 // pred_check
      _
    $region19: #{tpu_custom_call.1} parent=1 // pred_check_branch
      %121 = sbr.rel (0) target = $region21
    $region20: #{tpu_custom_call.1} parent=1 // pred_region
      %s123 = ssub.s32 32, 32
      %124 = vsyncadd [#allocation4], %s123
      %s126 = sshll.u32 [#allocation7], 4
      %s127 = int_to_ptr.vmem [resolvable:$true] %s126
      %129 = dma.vmem_to_hbm [thread:$0]  %s127, 32, %s2, [#allocation4]
    $region21: #{tpu_custom_call.1} parent=1 // pred_fallthru
      _
    // Predicated region
    $region22: #{tpu_custom_call.1} parent=1 // pred_check
      _
    $region23: #{tpu_custom_call.1} parent=1 // pred_check_branch
      %131 = sbr.rel (0) target = $region25
    $region24: #{tpu_custom_call.1} parent=1 // pred_region
      %132 = dma.done [#allocation4], 32
    $region25: #{tpu_custom_call.1} parent=1 // pred_fallthru
      _
    %133 = vsyncpa [#allocation3], 1
    %134 = vsyncpa [#allocation6], 1
    %135 = vsyncpa [#allocation4], 1

</llo_original>
